<compile_context>
chip_gen: v7x
topology: tpu7x:2x2x1
jax: 0.10.0
libtpu: 0.0.40
codegen_flags: <defaults>
</compile_context>

<pallas_src>
import jax
import jax.numpy as jnp
from jax.experimental import pallas as pl
from jax.experimental.pallas import tpu as pltpu

_H1, _H2 = 64, 32          # hidden widths fixed by the PyTorch module
_BIAS_LANES = 128          # one lane-aligned row per bias in the packed array


# --------------------------------------------------------------------------- #
# Kernel
# --------------------------------------------------------------------------- #
def _mlp_kernel(x_ref, w1_ref, w2_ref, w3_ref, b_ref, o_ref):
    cdt = w1_ref.dtype                      # compute dtype of matmul operands
    h1_dim = w1_ref.shape[1]                # 64
    h2_dim = w2_ref.shape[1]                # 32
    out_dim = w3_ref.shape[1]               # 2

    # Cast x to the compute dtype AFTER the DMA (VPU op; no extra HBM traffic).
    x = x_ref[...].astype(cdt)

    # Layer 1: Linear(input_dim, 64) + ReLU   (f32 accumulation on the MXU)
    h1 = jnp.dot(x, w1_ref[...], preferred_element_type=jnp.float32)
    h1 = jnp.maximum(h1 + b_ref[0:1, 0:h1_dim], 0.0)

    # Layer 2: Linear(64, 32) + ReLU
    h2 = jnp.dot(h1.astype(cdt), w2_ref[...], preferred_element_type=jnp.float32)
    h2 = jnp.maximum(h2 + b_ref[1:2, 0:h2_dim], 0.0)

    # Layer 3: Linear(32, 2) -> logits (no activation)
    h3 = jnp.dot(h2.astype(cdt), w3_ref[...], preferred_element_type=jnp.float32)
    o_ref[...] = (h3 + b_ref[2:3, 0:out_dim]).astype(o_ref.dtype)


# --------------------------------------------------------------------------- #
# Wrapper helpers
# --------------------------------------------------------------------------- #
def _round_up(n, m):
    return ((n + m - 1) // m) * m


def _physical_vmem_bytes():
    try:
        info = pltpu.get_tpu_info()
        v = getattr(info, "vmem_capacity_bytes", None)
        if v:
            return int(v)
    except Exception:
        pass
    return 64 * 1024 * 1024   # conservative fallback: v7x per-TensorCore VMEM


def _derive_batch_tile(input_dim, out_dim, x_dsize, c_dsize, vmem_bytes):
    """Rows per grid step from a VMEM budget (tiles + in-kernel intermediates)."""
    bytes_per_row = (
        2 * input_dim * x_dsize        # x tile, double-buffered by the pipeline
        + 2 * out_dim * 4              # out tile, double-buffered
        + input_dim * c_dsize          # x cast to compute dtype
        + _H1 * (4 + c_dsize)          # h1 f32 accum + compute-dtype copy
        + _H2 * (4 + c_dsize)          # h2 f32 accum + compute-dtype copy
        + out_dim * 4                  # logits (f32)
    )
    budget = int(vmem_bytes * 0.4)     # headroom for compiler temps / params
    tb = max(16, budget // bytes_per_row)
    # >=1 MiB of x per step is already on the amortization plateau; cap ~8 MiB.
    tb = min(tb, max(16, (8 << 20) // (input_dim * x_dsize)))
    return tb


def _pack_biases(b1, b2, b3):
    """Pack the three biases into one resident (3, 128) f32 array."""
    def row(b):
        b = jnp.asarray(b, jnp.float32).reshape(1, -1)
        assert b.shape[1] <= _BIAS_LANES
        return jnp.pad(b, ((0, 0), (0, _BIAS_LANES - b.shape[1])))
    return jnp.concatenate([row(b1), row(b2), row(b3)], axis=0)


# --------------------------------------------------------------------------- #
# Forward pass
# --------------------------------------------------------------------------- #
def health_classifier_forward(x, params, *, block_rows=None,
                              compute_dtype=jnp.bfloat16):
    """Fused forward pass of HealthClassifier.

    x: (B, input_dim), any float dtype (DMA'd as-is; cast in-kernel).
    params: (w1, b1, w2, b2, w3, b3), weights stored (in, out), biases (1, out).
    block_rows: optional batch-tile override (else derived from a VMEM budget).
    compute_dtype: dtype for matmul operands (bf16 default, f32 accumulation).
    """
    w1, b1, w2, b2, w3, b3 = params
    B, input_dim = x.shape
    out_dim = w3.shape[1]
    x_dsize = jnp.dtype(x.dtype).itemsize
    c_dsize = jnp.dtype(compute_dtype).itemsize

    phys_vmem = _physical_vmem_bytes()
    if block_rows is None:
        tb = _derive_batch_tile(input_dim, out_dim, x_dsize, c_dsize, phys_vmem)
    else:
        tb = int(block_rows)
    tb = min(tb, _round_up(B, 16))     # never bigger than one full-batch block
    tb = max(16, _round_up(tb, 16))    # multiple of 16 (bf16 sublane packing)

    grid = (pl.cdiv(B, tb),)           # no jnp.pad: partial final block is OK

    # Weights cast once here (tiny, resident); x is NOT cast in the wrapper.
    w1c = w1.astype(compute_dtype)
    w2c = w2.astype(compute_dtype)
    w3c = w3.astype(compute_dtype)
    b_all = _pack_biases(b1, b2, b3)

    x_spec = pl.BlockSpec((tb, input_dim), lambda i: (i, 0))
    out_spec = pl.BlockSpec((tb, out_dim), lambda i: (i, 0))
    resident = lambda a: pl.BlockSpec(a.shape, lambda i: (0, 0))

    flops = 2 * B * (input_dim * _H1 + _H1 * _H2 + _H2 * out_dim)
    param_bytes = sum(int(a.size) * jnp.dtype(a.dtype).itemsize
                      for a in (w1c, w2c, w3c, b_all))
    bytes_accessed = int(B * input_dim * x_dsize + B * out_dim * 4 + param_bytes)

    out = pl.pallas_call(
        _mlp_kernel,
        out_shape=jax.ShapeDtypeStruct((B, out_dim), jnp.float32),
        grid=grid,
        in_specs=[x_spec,
                  resident(w1c), resident(w2c), resident(w3c),
                  resident(b_all)],
        out_specs=out_spec,
        compiler_params=pltpu.CompilerParams(
            # Independent batch tiles -> shard across TCs on v7x.
            dimension_semantics=("parallel",),
            # Raise the scoped VMEM limit so the large tile double-buffers.
            vmem_limit_bytes=int(phys_vmem * 3 // 4),
        ),
        cost_estimate=pl.CostEstimate(
            flops=flops, transcendentals=0, bytes_accessed=bytes_accessed),
    )(x, w1c, w2c, w3c, b_all)

    return out


# --------------------------------------------------------------------------- #
# Params + reference
# --------------------------------------------------------------------------- #
def init_params(key, input_dim):
    """Deterministic init matching the PyTorch layer shapes.

    PyTorch nn.Linear stores weight as (out, in); we generate the transposed
    (in, out) layout directly so the kernel computes x @ W + b.
    """
    k1, k2, k3, k4, k5, k6 = jax.random.split(key, 6)
    scale = 0.1
    w1 = scale * jax.random.normal(k1, (input_dim, _H1), jnp.float32)
    b1 = scale * jax.random.normal(k4, (1, _H1), jnp.float32)
    w2 = scale * jax.random.normal(k2, (_H1, _H2), jnp.float32)
    b2 = scale * jax.random.normal(k5, (1, _H2), jnp.float32)
    w3 = scale * jax.random.normal(k3, (_H2, 2), jnp.float32)
    b3 = scale * jax.random.normal(k6, (1, 2), jnp.float32)
    return (w1, b1, w2, b2, w3, b3)


def _reference_forward(x, params):
    """Plain-JAX reference (mirrors the PyTorch module in f32)."""
    w1, b1, w2, b2, w3, b3 = params
    h = jnp.maximum(x @ w1 + b1, 0.0)
    h = jnp.maximum(h @ w2 + b2, 0.0)
    return h @ w3 + b3


if __name__ == "__main__":
    key = jax.random.PRNGKey(0)
    kx, kx2, kp = jax.random.split(key, 3)

    input_dim = 16  # number of soil-health tabular features
    params = init_params(kp, input_dim)

    # --- small batch, f32 compute: near-exact match vs reference ------------
    batch = 8
    x = jax.random.normal(kx, (batch, input_dim), jnp.float32)
    out = jax.block_until_ready(
        health_classifier_forward(x, params, compute_dtype=jnp.float32))
    ref = _reference_forward(x, params)
    assert out.shape == (batch, 2)
    assert jnp.allclose(out, ref, atol=1e-4, rtol=1e-4), "f32 path mismatch"

    # --- ragged batch + forced small tile: multi-step grid + partial block --
    batch2 = 100
    x2 = jax.random.normal(kx2, (batch2, input_dim), jnp.float32)
    out2 = jax.block_until_ready(
        health_classifier_forward(x2, params, block_rows=32,
                                  compute_dtype=jnp.float32))
    ref2 = _reference_forward(x2, params)
    assert out2.shape == (batch2, 2)
    assert jnp.allclose(out2, ref2, atol=1e-4, rtol=1e-4), "tiled f32 mismatch"

    # --- default bf16-operand path (f32 accumulation, in-kernel cast) -------
    out3 = jax.block_until_ready(health_classifier_forward(x2, params))
    assert out3.shape == (batch2, 2)
    assert jnp.allclose(out3, ref2, atol=5e-2, rtol=5e-2), "bf16 path mismatch"

    print("KERNEL_OK")
</pallas_src>

<mosaic_0001>
module attributes {stable_mosaic.version = 11 : i64} {
  func.func @_mlp_kernel(%arg0: i32, %arg1: memref<16x16xf32, #tpu.memory_space<vmem>>, %arg2: memref<16x64xf32, #tpu.memory_space<vmem>>, %arg3: memref<64x32xf32, #tpu.memory_space<vmem>>, %arg4: memref<32x2xf32, #tpu.memory_space<vmem>>, %arg5: memref<3x128xf32, #tpu.memory_space<vmem>>, %arg6: memref<16x2xf32, #tpu.memory_space<vmem>>) attributes {dimension_semantics = [#tpu.dimension_semantics<parallel>], iteration_bounds = array<i64: 1>, scalar_prefetch = 0 : i64, scratch_operands = 0 : i64, tpu.core_type = #tpu.core_type<tc>, window_params = [{transform_indices = @transform_0, window_bounds = array<i64: 16, 16>}, {pipeline_mode = #tpu.pipeline_mode<synchronous>, transform_indices = @transform_1, window_bounds = array<i64: 16, 64>}, {pipeline_mode = #tpu.pipeline_mode<synchronous>, transform_indices = @transform_2, window_bounds = array<i64: 64, 32>}, {pipeline_mode = #tpu.pipeline_mode<synchronous>, transform_indices = @transform_3, window_bounds = array<i64: 32, 2>}, {pipeline_mode = #tpu.pipeline_mode<synchronous>, transform_indices = @transform_4, window_bounds = array<i64: 3, 128>}, {transform_indices = @transform_5, window_bounds = array<i64: 16, 2>}]} {
    %c0 = arith.constant 0 : index
    %c0_0 = arith.constant 0 : index
    %0 = vector.load %arg1[%c0, %c0_0] : memref<16x16xf32, #tpu.memory_space<vmem>>, vector<16x16xf32>
    %c0_1 = arith.constant 0 : index
    %c0_2 = arith.constant 0 : index
    %1 = vector.load %arg2[%c0_1, %c0_2] : memref<16x64xf32, #tpu.memory_space<vmem>>, vector<16x64xf32>
    %cst = arith.constant dense<0.000000e+00> : vector<16x64xf32>
    %2 = tpu.matmul %0, %1, %cst {dimension_numbers = #tpu.dot_dimension_numbers<[1], [0], [0], [1], [0, 0, 1, 1], [], []>} : vector<16x16xf32>, vector<16x64xf32>, vector<16x64xf32> -> vector<16x64xf32>
    %c0_3 = arith.constant 0 : index
    %c0_4 = arith.constant 0 : index
    %3 = vector.load %arg5[%c0_3, %c0_4] : memref<3x128xf32, #tpu.memory_space<vmem>>, vector<1x64xf32>
    %4 = vector.broadcast %3 : vector<1x64xf32> to vector<16x64xf32>
    %5 = arith.addf %2, %4 : vector<16x64xf32>
    %cst_5 = arith.constant 0.000000e+00 : f32
    %6 = vector.broadcast %cst_5 : f32 to vector<16x64xf32>
    %7 = arith.maximumf %5, %6 : vector<16x64xf32>
    %c0_6 = arith.constant 0 : index
    %c0_7 = arith.constant 0 : index
    %8 = vector.load %arg3[%c0_6, %c0_7] : memref<64x32xf32, #tpu.memory_space<vmem>>, vector<64x32xf32>
    %cst_8 = arith.constant dense<0.000000e+00> : vector<16x32xf32>
    %9 = tpu.matmul %7, %8, %cst_8 {dimension_numbers = #tpu.dot_dimension_numbers<[1], [0], [0], [1], [0, 0, 1, 1], [], []>} : vector<16x64xf32>, vector<64x32xf32>, vector<16x32xf32> -> vector<16x32xf32>
    %c1 = arith.constant 1 : index
    %c0_9 = arith.constant 0 : index
    %10 = vector.load %arg5[%c1, %c0_9] : memref<3x128xf32, #tpu.memory_space<vmem>>, vector<1x32xf32>
    %11 = vector.broadcast %10 : vector<1x32xf32> to vector<16x32xf32>
    %12 = arith.addf %9, %11 : vector<16x32xf32>
    %cst_10 = arith.constant 0.000000e+00 : f32
    %13 = vector.broadcast %cst_10 : f32 to vector<16x32xf32>
    %14 = arith.maximumf %12, %13 : vector<16x32xf32>
    %c0_11 = arith.constant 0 : index
    %c0_12 = arith.constant 0 : index
    %15 = vector.load %arg4[%c0_11, %c0_12] : memref<32x2xf32, #tpu.memory_space<vmem>>, vector<32x2xf32>
    %cst_13 = arith.constant dense<0.000000e+00> : vector<16x2xf32>
    %16 = tpu.matmul %14, %15, %cst_13 {dimension_numbers = #tpu.dot_dimension_numbers<[1], [0], [0], [1], [0, 0, 1, 1], [], []>} : vector<16x32xf32>, vector<32x2xf32>, vector<16x2xf32> -> vector<16x2xf32>
    %c2 = arith.constant 2 : index
    %c0_14 = arith.constant 0 : index
    %17 = vector.load %arg5[%c2, %c0_14] : memref<3x128xf32, #tpu.memory_space<vmem>>, vector<1x2xf32>
    %18 = vector.broadcast %17 : vector<1x2xf32> to vector<16x2xf32>
    %19 = arith.addf %16, %18 : vector<16x2xf32>
    %c0_15 = arith.constant 0 : index
    %c0_16 = arith.constant 0 : index
    %20 = vector.load %arg6[%c0_15, %c0_16] : memref<16x2xf32, #tpu.memory_space<vmem>>, vector<16x2xf32>
    tpu.vector_store %arg6[%c0_15, %c0_16], %19 {strides = array<i32>} : memref<16x2xf32, #tpu.memory_space<vmem>>, vector<16x2xf32>,
    return
  }
  func.func @transform_0(%arg0: i32) -> (i32, i32) {
    %c0_i32 = arith.constant 0 : i32
    %c0_i32_0 = arith.constant 0 : i32
    return %arg0, %c0_i32 : i32, i32
  }
  func.func @transform_1(%arg0: i32) -> (i32, i32) {
    %c0_i32 = arith.constant 0 : i32
    %c0_i32_0 = arith.constant 0 : i32
    %c0_i32_1 = arith.constant 0 : i32
    return %c0_i32, %c0_i32_0 : i32, i32
  }
  func.func @transform_2(%arg0: i32) -> (i32, i32) {
    %c0_i32 = arith.constant 0 : i32
    %c0_i32_0 = arith.constant 0 : i32
    %c0_i32_1 = arith.constant 0 : i32
    return %c0_i32, %c0_i32_0 : i32, i32
  }
  func.func @transform_3(%arg0: i32) -> (i32, i32) {
    %c0_i32 = arith.constant 0 : i32
    %c0_i32_0 = arith.constant 0 : i32
    %c0_i32_1 = arith.constant 0 : i32
    return %c0_i32, %c0_i32_0 : i32, i32
  }
  func.func @transform_4(%arg0: i32) -> (i32, i32) {
    %c0_i32 = arith.constant 0 : i32
    %c0_i32_0 = arith.constant 0 : i32
    %c0_i32_1 = arith.constant 0 : i32
    return %c0_i32, %c0_i32_0 : i32, i32
  }
  func.func @transform_5(%arg0: i32) -> (i32, i32) {
    %c0_i32 = arith.constant 0 : i32
    %c0_i32_0 = arith.constant 0 : i32
    return %arg0, %c0_i32 : i32, i32
  }
}

</mosaic_0001>

<llo_original>
// kernel: tpu_custom_call.1
$region0: #{tpu_custom_call.1}
  #allocation0 [shape = 'u32[]', space=smem, size = 0x4, offset = 0x4, fixed_abs, tag = 'smem constant byte address 0x4 - core index']
  #allocation1 [shape = 'u32[144,128]{1,0:T(1,128)}', space=vmem, size = 0x12000, scoped, tag = 'internal scratch']
  %s0 = inlined_call_operand.vmem [shape: f32[8,16], index: 0, kind: input, shape index: {}]
  %s1 = inlined_call_operand.vmem [shape: f32[16,64], index: 1, kind: input, shape index: {}]
  %s2 = inlined_call_operand.vmem [shape: f32[64,32], index: 2, kind: input, shape index: {}]
  %s3 = inlined_call_operand.vmem [shape: f32[32,2], index: 3, kind: input, shape index: {}]
  %s4 = inlined_call_operand.vmem [shape: f32[3,128], index: 4, kind: input, shape index: {}]
  %s5 = inlined_call_operand.vmem [shape: f32[8,2], index: 5, kind: output, shape index: {}]
  %s6 = sld [smem:[#allocation0]]
  $region64: #{tpu_custom_call.1} parent=0
    _
  %s8 = ssub.s32 1, %s6
  %s9 = scalar_select 0, %s8, %s6
  $region1: #{tpu_custom_call.1} parent=0
    #allocation2 [shape = 'u8[8192]{0}', space=vmem, size = 0x2000, scoped, tag = 'output window, operand 0, single buffered']
    // Predicated region
    $region2: #{tpu_custom_call.1} parent=1 // pred_check
      _
    $region3: #{tpu_custom_call.1} parent=1 // pred_check_branch
      %11 = sbr.rel (0) target = $region5
    $region4: #{tpu_custom_call.1} parent=1 // pred_region
      _
    $region5: #{tpu_custom_call.1} parent=1 // pred_fallthru
      _
    // Predicated region
    $region6: #{tpu_custom_call.1} parent=1 // pred_check
      _
    $region7: #{tpu_custom_call.1} parent=1 // pred_check_branch
      %13 = sbr.rel (0) target = $region9
    $region8: #{tpu_custom_call.1} parent=1 // pred_region
      _
    $region9: #{tpu_custom_call.1} parent=1 // pred_fallthru
      _
    // Predicated region
    $region10: #{tpu_custom_call.1} parent=1 // pred_check
      _
    $region11: #{tpu_custom_call.1} parent=1 // pred_check_branch
      %15 = sbr.rel (0) target = $region13
    $region12: #{tpu_custom_call.1} parent=1 // pred_region
      _
    $region13: #{tpu_custom_call.1} parent=1 // pred_fallthru
      _
    // Predicated region
    $region14: #{tpu_custom_call.1} parent=1 // pred_check
      _
    $region15: #{tpu_custom_call.1} parent=1 // pred_check_branch
      %17 = sbr.rel (0) target = $region17
    $region16: #{tpu_custom_call.1} parent=1 // pred_region
      _
    $region17: #{tpu_custom_call.1} parent=1 // pred_fallthru
      _
    // Predicated region
    $region18: #{tpu_custom_call.1} parent=1 // pred_check
      _
    $region19: #{tpu_custom_call.1} parent=1 // pred_check_branch
      %19 = sbr.rel (0) target = $region21
    $region20: #{tpu_custom_call.1} parent=1 // pred_region
      _
    $region21: #{tpu_custom_call.1} parent=1 // pred_fallthru
      _
    %v20 = vld [vmem:[%s0] sm:$0xff]
    %v21 = vld [vmem:[%s0 + $0x8] sm:$0xff]
    %v22 = vld [vmem:[%s1] sm:$0xff]
    %v23 = vld [vmem:[%s1 + $0x8] sm:$0xff]
    %v24 = vld [vmem:[%s4] sm:$0x1]
    %v25 = vlaneseq
    %v26 = vshrl.u32 %v25, 7
    %v27 = vsub.s32 0, %v26
    %v28 = vrot.slane %v24, %v27
    %vm29 = vcmask 130048
    %v31 = vsel %vm29, %v20, 0
    %v34 = vsel %vm29, %v21, 0
    %36 = vmatprep.subr.mxu0 0.0
    %37 = vmatpush1.msra.mxu0 %v22
    %38 = vmatprep.subr.mxu0 0.0
    %39 = vmatpush1.msra.mxu0 %v23
    %40 = vmatprep.subr.mxu0 0.0
    %41 = vmatpush1.msra.mxu0 0.0
    %42 = vmatprep.subr.mxu0 0.0
    %43 = vmatpush1.msra.mxu0 0.0
    %44 = vmatprep.subr.mxu0 0.0
    %45 = vmatpush1.msra.mxu0 0.0
    %46 = vmatprep.subr.mxu0 0.0
    %47 = vmatpush1.msra.mxu0 0.0
    %48 = vmatprep.subr.mxu0 0.0
    %49 = vmatpush1.msra.mxu0 0.0
    %50 = vmatprep.subr.mxu0 0.0
    %51 = vmatpush1.msra.mxu0 0.0
    %52 = vmatprep.subr.mxu0 0.0
    %53 = vmatpush1.msra.mxu0 0.0
    %54 = vmatprep.subr.mxu0 0.0
    %55 = vmatpush1.msra.mxu0 0.0
    %56 = vmatprep.subr.mxu0 0.0
    %57 = vmatpush1.msra.mxu0 0.0
    %58 = vmatprep.subr.mxu0 0.0
    %59 = vmatpush1.msra.mxu0 0.0
    %60 = vmatprep.subr.mxu0 0.0
    %61 = vmatpush1.msra.mxu0 0.0
    %62 = vmatprep.subr.mxu0 0.0
    %63 = vmatpush1.msra.mxu0 0.0
    %64 = vmatprep.subr.mxu0 0.0
    %65 = vmatpush1.msra.mxu0 0.0
    %66 = vmatprep.subr.mxu0 0.0
    %67 = vmatpush1.msra.mxu0 0.0
    %68 = vmatprep.subr.mxu0 0.0
    %69 = vmatpush1.msra.mxu0 0.0
    %70 = vmatprep.subr.mxu0 0.0
    %71 = vmatpush1.msra.mxu0 0.0
    %72 = vmatprep.subr.mxu0 0.0
    %73 = vmatpush1.msra.mxu0 0.0
    %74 = vmatprep.subr.mxu0 0.0
    %75 = vmatpush1.msra.mxu0 0.0
    %76 = vmatprep.subr.mxu0 0.0
    %77 = vmatpush1.msra.mxu0 0.0
    %78 = vmatprep.subr.mxu0 0.0
    %79 = vmatpush1.msra.mxu0 0.0
    %80 = vmatprep.subr.mxu0 0.0
    %81 = vmatpush1.msra.mxu0 0.0
    %82 = vmatprep.subr.mxu0 0.0
    %83 = vmatpush1.msra.mxu0 0.0
    %84 = vmatprep.subr.mxu0 0.0
    %85 = vmatpush1.msra.mxu0 0.0
    %86 = vmatprep.subr.mxu0 0.0
    %87 = vmatpush1.msra.mxu0 0.0
    %88 = vmatprep.subr.mxu0 0.0
    %89 = vmatpush1.msra.mxu0 0.0
    %90 = vmatprep.subr.mxu0 0.0
    %91 = vmatpush1.msra.mxu0 0.0
    %92 = vmatprep.subr.mxu0 0.0
    %93 = vmatpush1.msra.mxu0 0.0
    %94 = vmatprep.subr.mxu0 0.0
    %95 = vmatpush1.msra.mxu0 0.0
    %96 = vmatprep.subr.mxu0 0.0
    %97 = vmatpush1.msra.mxu0 0.0
    %98 = vmatprep.subr.mxu0 0.0
    %99 = vmatpush1.msra.mxu0 0.0
    %100 = vmatprep.mubr.f32.mxu0 0.0
    %101 = vmatmul.mubr.f32.gmra.mrb[0].mxu0 %v31
    %v102 = vpop.f32.mrb[0].mxu0
    %v103 = vadd.f32 %v28, %v102
    %v104 = vpop.f32.mrb[0].mxu0
    %105 = vmatprep.mubr.f32.mxu0 0.0
    %106 = vmatmul.mubr.f32.gmra.mrb[0].mxu0 %v34
    %v107 = vpop.f32.mrb[0].mxu0
    %v108 = vadd.f32 %v28, %v107
    %v109 = vpop.f32.mrb[0].mxu0
    %110 = vdwg.mxu0
    %v111 = vmax.f32 %v103, 0.0
    %v112 = vmax.f32 %v108, 0.0
    %v113 = vld [vmem:[%s2] sm:$0xff]
    %v114 = vld [vmem:[%s2 + $0x8] sm:$0xff]
    %v115 = vld [vmem:[%s2 + $0x10] sm:$0xff]
    %v116 = vld [vmem:[%s2 + $0x18] sm:$0xff]
    %v117 = vld [vmem:[%s2 + $0x20] sm:$0xff]
    %v118 = vld [vmem:[%s2 + $0x28] sm:$0xff]
    %v119 = vld [vmem:[%s2 + $0x30] sm:$0xff]
    %v120 = vld [vmem:[%s2 + $0x38] sm:$0xff]
    %v121 = vld [vmem:[%s4 + $0x1] sm:$0x1]
    %v122 = vlaneseq
    %v123 = vshrl.u32 %v122, 7
    %v124 = vsub.s32 0, %v123
    %v125 = vrot.slane %v121, %v124
    %vm126 = vcmask 523264
    %v128 = vsel %vm126, %v111, 0
    %v131 = vsel %vm126, %v112, 0
    %133 = vmatprep.subr.mxu0 0.0
    %134 = vmatpush1.msra.mxu0 %v113
    %135 = vmatprep.subr.mxu0 0.0
    %136 = vmatpush1.msra.mxu0 %v114
    %137 = vmatprep.subr.mxu0 0.0
    %138 = vmatpush1.msra.mxu0 %v115
    %139 = vmatprep.subr.mxu0 0.0
    %140 = vmatpush1.msra.mxu0 %v116
    %141 = vmatprep.subr.mxu0 0.0
    %142 = vmatpush1.msra.mxu0 %v117
    %143 = vmatprep.subr.mxu0 0.0
    %144 = vmatpush1.msra.mxu0 %v118
    %145 = vmatprep.subr.mxu0 0.0
    %146 = vmatpush1.msra.mxu0 %v119
    %147 = vmatprep.subr.mxu0 0.0
    %148 = vmatpush1.msra.mxu0 %v120
    %149 = vmatprep.subr.mxu0 0.0
    %150 = vmatpush1.msra.mxu0 0.0
    %151 = vmatprep.subr.mxu0 0.0
    %152 = vmatpush1.msra.mxu0 0.0
    %153 = vmatprep.subr.mxu0 0.0
    %154 = vmatpush1.msra.mxu0 0.0
    %155 = vmatprep.subr.mxu0 0.0
    %156 = vmatpush1.msra.mxu0 0.0
    %157 = vmatprep.subr.mxu0 0.0
    %158 = vmatpush1.msra.mxu0 0.0
    %159 = vmatprep.subr.mxu0 0.0
    %160 = vmatpush1.msra.mxu0 0.0
    %161 = vmatprep.subr.mxu0 0.0
    %162 = vmatpush1.msra.mxu0 0.0
    %163 = vmatprep.subr.mxu0 0.0
    %164 = vmatpush1.msra.mxu0 0.0
    %165 = vmatprep.subr.mxu0 0.0
    %166 = vmatpush1.msra.mxu0 0.0
    %167 = vmatprep.subr.mxu0 0.0
    %168 = vmatpush1.msra.mxu0 0.0
    %169 = vmatprep.subr.mxu0 0.0
    %170 = vmatpush1.msra.mxu0 0.0
    %171 = vmatprep.subr.mxu0 0.0
    %172 = vmatpush1.msra.mxu0 0.0
    %173 = vmatprep.subr.mxu0 0.0
    %174 = vmatpush1.msra.mxu0 0.0
    %175 = vmatprep.subr.mxu0 0.0
    %176 = vmatpush1.msra.mxu0 0.0
    %177 = vmatprep.subr.mxu0 0.0
    %178 = vmatpush1.msra.mxu0 0.0
    %179 = vmatprep.subr.mxu0 0.0
    %180 = vmatpush1.msra.mxu0 0.0
    %181 = vmatprep.subr.mxu0 0.0
    %182 = vmatpush1.msra.mxu0 0.0
    %183 = vmatprep.subr.mxu0 0.0
    %184 = vmatpush1.msra.mxu0 0.0
    %185 = vmatprep.subr.mxu0 0.0
    %186 = vmatpush1.msra.mxu0 0.0
    %187 = vmatprep.subr.mxu0 0.0
    %188 = vmatpush1.msra.mxu0 0.0
    %189 = vmatprep.subr.mxu0 0.0
    %190 = vmatpush1.msra.mxu0 0.0
    %191 = vmatprep.subr.mxu0 0.0
    %192 = vmatpush1.msra.mxu0 0.0
    %193 = vmatprep.subr.mxu0 0.0
    %194 = vmatpush1.msra.mxu0 0.0
    %195 = vmatprep.subr.mxu0 0.0
    %196 = vmatpush1.msra.mxu0 0.0
    %197 = vmatprep.mubr.f32.mxu0 0.0
    %198 = vmatmul.mubr.f32.gmra.mrb[0].mxu0 %v128
    %v199 = vpop.f32.mrb[0].mxu0
    %v200 = vadd.f32 %v125, %v199
    %v201 = vpop.f32.mrb[0].mxu0
    %202 = vmatprep.mubr.f32.mxu0 0.0
    %203 = vmatmul.mubr.f32.gmra.mrb[0].mxu0 %v131
    %v204 = vpop.f32.mrb[0].mxu0
    %v205 = vadd.f32 %v125, %v204
    %v206 = vpop.f32.mrb[0].mxu0
    %207 = vdwg.mxu0
    %v208 = vmax.f32 %v200, 0.0
    %v209 = vmax.f32 %v205, 0.0
    %v210 = vld [vmem:[%s3] sm:$0xff]
    %v211 = vld [vmem:[%s3 + $0x8] sm:$0xff]
    %v212 = vld [vmem:[%s3 + $0x10] sm:$0xff]
    %v213 = vld [vmem:[%s3 + $0x18] sm:$0xff]
    %v214 = vld [vmem:[%s4 + $0x2] sm:$0x1]
    %v215 = vlaneseq
    %v216 = vshrl.u32 %v215, 7
    %v217 = vsub.s32 0, %v216
    %v218 = vrot.slane %v214, %v217
    %vm219 = vcmask 261120
    %v221 = vsel %vm219, %v208, 0
    %v224 = vsel %vm219, %v209, 0
    %226 = vmatprep.subr.mxu0 0.0
    %227 = vmatpush1.msra.mxu0 %v210
    %228 = vmatprep.subr.mxu0 0.0
    %229 = vmatpush1.msra.mxu0 %v211
    %230 = vmatprep.subr.mxu0 0.0
    %231 = vmatpush1.msra.mxu0 %v212
    %232 = vmatprep.subr.mxu0 0.0
    %233 = vmatpush1.msra.mxu0 %v213
    %234 = vmatprep.subr.mxu0 0.0
    %235 = vmatpush1.msra.mxu0 0.0
    %236 = vmatprep.subr.mxu0 0.0
    %237 = vmatpush1.msra.mxu0 0.0
    %238 = vmatprep.subr.mxu0 0.0
    %239 = vmatpush1.msra.mxu0 0.0
    %240 = vmatprep.subr.mxu0 0.0
    %241 = vmatpush1.msra.mxu0 0.0
    %242 = vmatprep.subr.mxu0 0.0
    %243 = vmatpush1.msra.mxu0 0.0
    %244 = vmatprep.subr.mxu0 0.0
    %245 = vmatpush1.msra.mxu0 0.0
    %246 = vmatprep.subr.mxu0 0.0
    %247 = vmatpush1.msra.mxu0 0.0
    %248 = vmatprep.subr.mxu0 0.0
    %249 = vmatpush1.msra.mxu0 0.0
    %250 = vmatprep.subr.mxu0 0.0
    %251 = vmatpush1.msra.mxu0 0.0
    %252 = vmatprep.subr.mxu0 0.0
    %253 = vmatpush1.msra.mxu0 0.0
    %254 = vmatprep.subr.mxu0 0.0
    %255 = vmatpush1.msra.mxu0 0.0
    %256 = vmatprep.subr.mxu0 0.0
    %257 = vmatpush1.msra.mxu0 0.0
    %258 = vmatprep.subr.mxu0 0.0
    %259 = vmatpush1.msra.mxu0 0.0
    %260 = vmatprep.subr.mxu0 0.0
    %261 = vmatpush1.msra.mxu0 0.0
    %262 = vmatprep.subr.mxu0 0.0
    %263 = vmatpush1.msra.mxu0 0.0
    %264 = vmatprep.subr.mxu0 0.0
    %265 = vmatpush1.msra.mxu0 0.0
    %266 = vmatprep.subr.mxu0 0.0
    %267 = vmatpush1.msra.mxu0 0.0
    %268 = vmatprep.subr.mxu0 0.0
    %269 = vmatpush1.msra.mxu0 0.0
    %270 = vmatprep.subr.mxu0 0.0
    %271 = vmatpush1.msra.mxu0 0.0
    %272 = vmatprep.subr.mxu0 0.0
    %273 = vmatpush1.msra.mxu0 0.0
    %274 = vmatprep.subr.mxu0 0.0
    %275 = vmatpush1.msra.mxu0 0.0
    %276 = vmatprep.subr.mxu0 0.0
    %277 = vmatpush1.msra.mxu0 0.0
    %278 = vmatprep.subr.mxu0 0.0
    %279 = vmatpush1.msra.mxu0 0.0
    %280 = vmatprep.subr.mxu0 0.0
    %281 = vmatpush1.msra.mxu0 0.0
    %282 = vmatprep.subr.mxu0 0.0
    %283 = vmatpush1.msra.mxu0 0.0
    %284 = vmatprep.subr.mxu0 0.0
    %285 = vmatpush1.msra.mxu0 0.0
    %286 = vmatprep.subr.mxu0 0.0
    %287 = vmatpush1.msra.mxu0 0.0
    %288 = vmatprep.subr.mxu0 0.0
    %289 = vmatpush1.msra.mxu0 0.0
    %290 = vmatprep.mubr.f32.mxu0 0.0
    %291 = vmatmul.mubr.f32.gmra.mrb[0].mxu0 %v221
    %v292 = vpop.f32.mrb[0].mxu0
    %v293 = vadd.f32 %v218, %v292
    %v294 = vpop.f32.mrb[0].mxu0
    %295 = vmatprep.mubr.f32.mxu0 0.0
    %296 = vmatmul.mubr.f32.gmra.mrb[0].mxu0 %v224
    %v297 = vpop.f32.mrb[0].mxu0
    %v298 = vadd.f32 %v218, %v297
    %v299 = vpop.f32.mrb[0].mxu0
    %300 = vdwg.mxu0
    %vm301 = vcmask 15360
    %302 = vst.msk [vmem:[#allocation2] sm:$0xff] %vm301, %v293
    %303 = vst.msk [vmem:[#allocation2 + $0x8] sm:$0xff] %vm301, %v298
    // Predicated region
    $region22: #{tpu_custom_call.1} parent=1 // pred_check
      _
    $region23: #{tpu_custom_call.1} parent=1 // pred_check_branch
      %305 = sbr.rel (0) target = $region25
    $region24: #{tpu_custom_call.1} parent=1 // pred_region
      // Predicated region
      $region26: #{tpu_custom_call.1} parent=24 // pred_check
        _
      $region27: #{tpu_custom_call.1} parent=24 // pred_check_branch
        %307 = sbr.rel (0) target = $region29
      $region28: #{tpu_custom_call.1} parent=24 // pred_region
        // Predicated region
        $region30: #{tpu_custom_call.1} parent=28 // pred_check
          _
        $region31: #{tpu_custom_call.1} parent=28 // pred_check_branch
          %309 = sbr.rel (0) target = $region33
        $region32: #{tpu_custom_call.1} parent=28 // pred_region
          // Predicated region
          $region45: #{tpu_custom_call.1} parent=32 // pred_check
            _
          $region46: #{tpu_custom_call.1} parent=32 // pred_check_branch
            %324 = sbr.rel (0) target = $region48
          $region47: #{tpu_custom_call.1} parent=32 // pred_region
            loop: start=0, step=1, limit=1
            $region49: #{tpu_custom_call.1} parent=47 // loop_pre_header
              _
            $region50: #{tpu_custom_call.1} parent=47 // loop_header
              %s326 = sphi 0, %s330
              %p327 = scmp.ge.s32.totalorder %s326, 1
              %s331 = sphi [#allocation2], [#allocation2]
              %s332 = sphi %s5, %s5
            $region51: #{tpu_custom_call.1} parent=47 // loop_header_branch
              %329 = sbr.rel (%p327) target = $region55
            $region52: #{tpu_custom_call.1} parent=47 // loop_body
              %v333 = vld [vmem:[%s331] sm:$0xff]
              %334 = vst [vmem:[%s332] sm:$0xff] %v333
            $region53: #{tpu_custom_call.1} parent=47 // loop_footer
              %s330 = sadd.s32 1, %s326
            $region54: #{tpu_custom_call.1} parent=47 // loop_footer_branch
              %325 = sbr.rel target = $region50
            $region55: #{tpu_custom_call.1} parent=47 // loop_exit
              _
          $region48: #{tpu_custom_call.1} parent=32 // pred_fallthru
            _
          // Predicated region
          $region56: #{tpu_custom_call.1} parent=32 // pred_check
            _
          $region57: #{tpu_custom_call.1} parent=32 // pred_check_branch
            %336 = sbr.rel target = $region59
          $region58: #{tpu_custom_call.1} parent=32 // pred_region
            _
          $region59: #{tpu_custom_call.1} parent=32 // pred_fallthru
            _
        $region33: #{tpu_custom_call.1} parent=28 // pred_fallthru
          _
        // Predicated region
        $region34: #{tpu_custom_call.1} parent=28 // pred_check
          _
        $region35: #{tpu_custom_call.1} parent=28 // pred_check_branch
          %311 = sbr.rel target = $region37
        $region36: #{tpu_custom_call.1} parent=28 // pred_region
          loop: start=0, step=1, limit=1
          $region38: #{tpu_custom_call.1} parent=36 // loop_pre_header
            _
          $region39: #{tpu_custom_call.1} parent=36 // loop_header
            %s314 = sphi 0, %s318
            %p315 = scmp.ge.s32.totalorder %s314, 1
            %s319 = sphi [#allocation2], [#allocation2]
            %s320 = sphi %s5, %s5
          $region40: #{tpu_custom_call.1} parent=36 // loop_header_branch
            %317 = sbr.rel (%p315) target = $region44
          $region41: #{tpu_custom_call.1} parent=36 // loop_body
            %v321 = vld [vmem:[%s319] sm:$0xff]
            %322 = vst [vmem:[%s320] sm:$0xff] %v321
          $region42: #{tpu_custom_call.1} parent=36 // loop_footer
            %s318 = sadd.s32 1, %s314
          $region43: #{tpu_custom_call.1} parent=36 // loop_footer_branch
            %313 = sbr.rel target = $region39
          $region44: #{tpu_custom_call.1} parent=36 // loop_exit
            _
        $region37: #{tpu_custom_call.1} parent=28 // pred_fallthru
          _
      $region29: #{tpu_custom_call.1} parent=24 // pred_fallthru
        _
      %337 = vnop
    $region25: #{tpu_custom_call.1} parent=1 // pred_fallthru
      _
    // Predicated region
    $region60: #{tpu_custom_call.1} parent=1 // pred_check
      _
    $region61: #{tpu_custom_call.1} parent=1 // pred_check_branch
      %339 = sbr.rel (0) target = $region63
    $region62: #{tpu_custom_call.1} parent=1 // pred_region
      _
    $region63: #{tpu_custom_call.1} parent=1 // pred_fallthru
      _

</llo_original>
